<compile_context>
chip_gen: v5e
topology: v5e:2x2
jax: 0.10.0
libtpu: 0.0.40
codegen_flags: <defaults>
</compile_context>

<pallas_src>
import functools

import jax
import jax.numpy as jnp
from jax.experimental import pallas as pl
from jax.experimental.pallas import tpu as pltpu

LANE = 128
# 48 MiB: under v7x's 64 MiB physical VMEM, well above v5e/v6e scoped defaults.
_VMEM_LIMIT = 48 * 1024 * 1024


# ----------------------------- Pallas kernels ------------------------------

def gcn_layer_kernel(a_ref, x_ref, *rest, apply_relu, transform_in_finalize, tk):
    """Hidden GCN layer row tile.

    acc_i += A[i, k] @ X[k]   (bf16 MXU inputs, f32 accumulation)
    finalize (k == last): h_i = (acc_i [@ W]) + b [; relu]  -> bf16 output.
    X is VMEM-resident (constant-index BlockSpec); the k-th slab is sliced
    in-kernel, so X is fetched from HBM once per layer.
    """
    if transform_in_finalize:
        w_ref, b_ref, o_ref, acc_ref = rest
    else:
        b_ref, o_ref, acc_ref = rest
        w_ref = None
    k = pl.program_id(1)

    @pl.when(k == 0)
    def _init():
        acc_ref[...] = jnp.zeros_like(acc_ref)

    x_tile = x_ref[pl.ds(pl.multiple_of(k * tk, tk), tk), :]
    acc_ref[...] += jnp.dot(a_ref[...], x_tile,
                            preferred_element_type=jnp.float32)

    @pl.when(k == pl.num_programs(1) - 1)
    def _finalize():
        acc = acc_ref[...]
        if transform_in_finalize:
            # aggregate-first order: small bf16 feature transform per row tile.
            acc = jnp.dot(acc.astype(jnp.bfloat16), w_ref[...],
                          preferred_element_type=jnp.float32)
        out = acc + b_ref[...]
        if apply_relu:
            out = jnp.maximum(out, 0.0)
        o_ref[...] = out.astype(o_ref.dtype)


def gcn_last_pool_kernel(a_ref, x_ref, m_ref, *rest, transform_in_finalize, tk):
    """Last GCN layer fused with per-row-tile mean-pool PARTIALS.

    The pooled partial is an output block indexed by the row-tile axis i
    (no cross-i accumulation), so i can stay "parallel" for v7x megacore.
    """
    if transform_in_finalize:
        w_ref, b_ref, o_ref, acc_ref = rest
    else:
        b_ref, o_ref, acc_ref = rest
        w_ref = None
    k = pl.program_id(1)

    @pl.when(k == 0)
    def _init():
        acc_ref[...] = jnp.zeros_like(acc_ref)

    x_tile = x_ref[pl.ds(pl.multiple_of(k * tk, tk), tk), :]
    acc_ref[...] += jnp.dot(a_ref[...], x_tile,
                            preferred_element_type=jnp.float32)

    @pl.when(k == pl.num_programs(1) - 1)
    def _finalize():
        acc = acc_ref[...]
        if transform_in_finalize:
            acc = jnp.dot(acc.astype(jnp.bfloat16), w_ref[...],
                          preferred_element_type=jnp.float32)
        h_tile = acc + b_ref[...]            # last conv: no activation (jk=None)
        # partial mean-pool contribution of this row tile: (G, tm) @ (tm, H)
        o_ref[0] = jnp.dot(m_ref[...], h_tile.astype(jnp.bfloat16),
                           preferred_element_type=jnp.float32)


def head_kernel(p_ref, w_ref, b_ref, o_ref):
    """Reduce pooled partials over row tiles and apply the Linear head."""
    pooled = jnp.sum(p_ref[...], axis=0)                     # (G, H) f32
    o_ref[...] = (jnp.dot(pooled.astype(jnp.bfloat16), w_ref[...],
                          preferred_element_type=jnp.float32)
                  + b_ref[...]).astype(o_ref.dtype)


def node_transform_kernel(x_ref, w_ref, o_ref):
    """X @ W per node-row tile (used only when in_features > out_features)."""
    o_ref[...] = jnp.dot(x_ref[...], w_ref[...],
                         preferred_element_type=jnp.float32).astype(o_ref.dtype)


# ------------------------------ Pallas wrappers ----------------------------

def gcn_layer(a_hat, x, w, b, *, apply_relu, transform_in_finalize, tm, tk):
    n_p = a_hat.shape[0]
    f_in = x.shape[1]
    h_out = w.shape[1]
    acc_w = f_in if transform_in_finalize else h_out
    grid = (n_p // tm, n_p // tk)

    in_specs = [
        pl.BlockSpec((tm, tk), lambda i, k: (i, k)),          # A_hat tile (bf16)
        pl.BlockSpec((n_p, f_in), lambda i, k: (0, 0)),       # X: VMEM-resident, DMA once
    ]
    args = [a_hat, x]
    if transform_in_finalize:
        in_specs.append(pl.BlockSpec((w.shape[0], h_out), lambda i, k: (0, 0)))
        args.append(w)
    in_specs.append(pl.BlockSpec((1, h_out), lambda i, k: (0, 0)))
    args.append(b.reshape(1, -1))

    flops = 2 * n_p * n_p * f_in + 2 * n_p * f_in * h_out
    bytes_accessed = (a_hat.size * a_hat.dtype.itemsize
                      + x.size * x.dtype.itemsize
                      + (w.size * w.dtype.itemsize if transform_in_finalize else 0)
                      + b.size * b.dtype.itemsize
                      + n_p * h_out * 2)                      # bf16 h writeback

    kern = functools.partial(gcn_layer_kernel, apply_relu=apply_relu,
                             transform_in_finalize=transform_in_finalize, tk=tk)
    return pl.pallas_call(
        kern,
        out_shape=jax.ShapeDtypeStruct((n_p, h_out), jnp.bfloat16),
        grid_spec=pltpu.PrefetchScalarGridSpec(
            num_scalar_prefetch=0,
            grid=grid,
            in_specs=in_specs,
            out_specs=pl.BlockSpec((tm, h_out), lambda i, k: (i, 0)),
            scratch_shapes=[pltpu.VMEM((tm, acc_w), jnp.float32)],
        ),
        compiler_params=pltpu.CompilerParams(
            dimension_semantics=("parallel", "arbitrary"),
            vmem_limit_bytes=_VMEM_LIMIT,
        ),
        cost_estimate=pl.CostEstimate(flops=flops, transcendentals=0,
                                      bytes_accessed=bytes_accessed),
    )(*args)


def gcn_last_pool(a_hat, x, w, b, m_norm, *, transform_in_finalize, tm, tk):
    """Last GCN layer; returns per-row-tile pooled partials [nt, G, H] (f32)."""
    n_p = a_hat.shape[0]
    f_in = x.shape[1]
    h_out = w.shape[1]
    g = m_norm.shape[0]
    acc_w = f_in if transform_in_finalize else h_out
    nt = n_p // tm
    grid = (nt, n_p // tk)

    in_specs = [
        pl.BlockSpec((tm, tk), lambda i, k: (i, k)),          # A_hat tile (bf16)
        pl.BlockSpec((n_p, f_in), lambda i, k: (0, 0)),       # X resident
        pl.BlockSpec((g, tm), lambda i, k: (0, i)),           # mean-pool slice (bf16)
    ]
    args = [a_hat, x, m_norm]
    if transform_in_finalize:
        in_specs.append(pl.BlockSpec((w.shape[0], h_out), lambda i, k: (0, 0)))
        args.append(w)
    in_specs.append(pl.BlockSpec((1, h_out), lambda i, k: (0, 0)))
    args.append(b.reshape(1, -1))

    flops = (2 * n_p * n_p * f_in + 2 * n_p * f_in * h_out + 2 * g * n_p * h_out)
    bytes_accessed = (a_hat.size * a_hat.dtype.itemsize
                      + x.size * x.dtype.itemsize
                      + m_norm.size * m_norm.dtype.itemsize
                      + (w.size * w.dtype.itemsize if transform_in_finalize else 0)
                      + b.size * b.dtype.itemsize
                      + nt * g * h_out * 4)

    kern = functools.partial(gcn_last_pool_kernel,
                             transform_in_finalize=transform_in_finalize, tk=tk)
    return pl.pallas_call(
        kern,
        out_shape=jax.ShapeDtypeStruct((nt, g, h_out), jnp.float32),
        grid_spec=pltpu.PrefetchScalarGridSpec(
            num_scalar_prefetch=0,
            grid=grid,
            in_specs=in_specs,
            out_specs=pl.BlockSpec((1, g, h_out), lambda i, k: (i, 0, 0)),
            scratch_shapes=[pltpu.VMEM((tm, acc_w), jnp.float32)],
        ),
        compiler_params=pltpu.CompilerParams(
            dimension_semantics=("parallel", "arbitrary"),
            vmem_limit_bytes=_VMEM_LIMIT,
        ),
        cost_estimate=pl.CostEstimate(flops=flops, transcendentals=0,
                                      bytes_accessed=bytes_accessed),
    )(*args)


def pool_head(partials, head_w, head_b):
    """Tiny epilogue: sum pooled partials over row tiles, apply Linear head."""
    nt, g, h = partials.shape
    o = head_w.shape[1]
    return pl.pallas_call(
        head_kernel,
        out_shape=jax.ShapeDtypeStruct((g, o), jnp.float32),
        grid_spec=pltpu.PrefetchScalarGridSpec(
            num_scalar_prefetch=0,
            grid=(1,),
            in_specs=[pl.BlockSpec((nt, g, h), lambda i: (0, 0, 0)),
                      pl.BlockSpec((h, o), lambda i: (0, 0)),
                      pl.BlockSpec((1, o), lambda i: (0, 0))],
            out_specs=pl.BlockSpec((g, o), lambda i: (0, 0)),
        ),
        compiler_params=pltpu.CompilerParams(
            dimension_semantics=("arbitrary",),
            vmem_limit_bytes=_VMEM_LIMIT,
        ),
    )(partials, head_w, head_b.reshape(1, -1))


def node_transform(x, w, *, tm):
    n_p, f = x.shape
    h = w.shape[1]
    return pl.pallas_call(
        node_transform_kernel,
        out_shape=jax.ShapeDtypeStruct((n_p, h), jnp.bfloat16),
        grid_spec=pltpu.PrefetchScalarGridSpec(
            num_scalar_prefetch=0,
            grid=(n_p // tm,),
            in_specs=[pl.BlockSpec((tm, f), lambda i: (i, 0)),
                      pl.BlockSpec((f, h), lambda i: (0, 0))],
            out_specs=pl.BlockSpec((tm, h), lambda i: (i, 0)),
        ),
        compiler_params=pltpu.CompilerParams(
            dimension_semantics=("parallel",),
            vmem_limit_bytes=_VMEM_LIMIT,
        ),
    )(x, w)


# ------------------------------- plain-JAX glue ----------------------------

def gcn_norm_adj(edge_index, num_nodes):
    """A_hat = D^{-1/2} (A + I) D^{-1/2}, dense [N, N], PyG gcn_norm semantics.

    Duplicate (parallel) non-self-loop edges SUM (each weight 1); explicit
    self-loops are collapsed to a single weight-1 self-loop per node
    (add_remaining_self_loops with fill_value=1).
    """
    src, dst = edge_index[0], edge_index[1]
    a = jnp.zeros((num_nodes, num_nodes), jnp.float32).at[dst, src].add(1.0)
    eye = jnp.eye(num_nodes, dtype=jnp.float32)
    a = a * (1.0 - eye) + eye
    deg = a.sum(axis=1)
    dinv = jnp.where(deg > 0, jax.lax.rsqrt(deg), 0.0)
    return a * dinv[:, None] * dinv[None, :]


def mean_pool_matrix(batch, num_graphs, num_nodes):
    """M_norm[g, n] = 1/|V_g| if node n belongs to graph g else 0."""
    m = (batch[None, :] == jnp.arange(num_graphs)[:, None]).astype(jnp.float32)
    counts = jnp.maximum(m.sum(axis=1, keepdims=True), 1.0)
    return m / counts


def builtin_gnn_forward(params, x, a_hat, m_norm, *, in_ch, hidden, tm, tk):
    """Padded forward pass. x / a_hat / m_norm are padded bf16; biases f32."""
    num_layers = len(params["conv_w"])
    h = x
    f_logical = in_ch
    partials = None
    # TODO(synk): dropout between layers is train-time only; omitted (eval semantics).
    for l in range(num_layers):
        w, b = params["conv_w"][l], params["conv_b"][l]
        agg_first = f_logical <= hidden          # pick cheaper matmul order (logical dims)
        if not agg_first:                        # transform-first order (F > H)
            h = node_transform(h, w, tm=tm)
        if l < num_layers - 1:
            h = gcn_layer(a_hat, h, w, b, apply_relu=True,
                          transform_in_finalize=agg_first, tm=tm, tk=tk)
        else:
            partials = gcn_last_pool(a_hat, h, w, b, m_norm,
                                     transform_in_finalize=agg_first, tm=tm, tk=tk)
        f_logical = hidden
    return pool_head(partials, params["head_w"], params["head_b"])


def reference_forward(params, x, a_hat, m_norm):
    """Pure-JAX f32 reference with the PyTorch module's semantics."""
    h = x
    num_layers = len(params["conv_w"])
    for l in range(num_layers):
        h = a_hat @ (h @ params["conv_w"][l]) + params["conv_b"][l]
        if l < num_layers - 1:
            h = jax.nn.relu(h)
    pooled = m_norm @ h
    return pooled @ params["head_w"] + params["head_b"]


def init_params(key, in_channels, hidden_channels, num_layers, out_channels):
    conv_w, conv_b = [], []
    dims = [in_channels] + [hidden_channels] * num_layers
    for l in range(num_layers):
        key, k = jax.random.split(key)
        conv_w.append(0.1 * jax.random.normal(k, (dims[l], dims[l + 1]), jnp.float32))
        conv_b.append(jnp.zeros((dims[l + 1],), jnp.float32))
    key, k1, k2 = jax.random.split(key, 3)
    head_w = 0.1 * jax.random.normal(k1, (hidden_channels, out_channels), jnp.float32)
    head_b = 0.01 * jax.random.normal(k2, (out_channels,), jnp.float32)
    return {"conv_w": conv_w, "conv_b": conv_b, "head_w": head_w, "head_b": head_b}


# ------------------------------ padding helpers -----------------------------

def _round_up(x, m):
    return ((x + m - 1) // m) * m


def _pad2(x, shape):
    return jnp.pad(x, [(0, s - d) for d, s in zip(x.shape, shape)])


def _pad1(x, n):
    return jnp.pad(x, (0, n - x.shape[0]))


def _pick_tile(n, candidates):
    for c in candidates:
        if n % c == 0:
            return c
    return n


# ----------------------------------- main -----------------------------------

if __name__ == "__main__":
    N_NODES = 16       # total nodes across the batch of graphs
    IN_CH = 8
    HIDDEN = 32
    NUM_LAYERS = 3
    OUT_CH = 4
    NUM_GRAPHS = 2
    NUM_EDGES = 40

    key = jax.random.PRNGKey(0)
    key, kx, ke = jax.random.split(key, 3)

    # Synthetic graph batch: node features, directed edges, graph-id per node.
    x = jax.random.normal(kx, (N_NODES, IN_CH), jnp.float32)
    edge_index = jax.random.randint(ke, (2, NUM_EDGES), 0, N_NODES, jnp.int32)
    batch = jnp.concatenate(
        [jnp.zeros((N_NODES // 2,), jnp.int32),
         jnp.ones((N_NODES - N_NODES // 2,), jnp.int32)]
    )

    params = init_params(key, IN_CH, HIDDEN, NUM_LAYERS, OUT_CH)

    a_hat = gcn_norm_adj(edge_index, N_NODES)            # f32 [N, N]
    m_norm = mean_pool_matrix(batch, NUM_GRAPHS, N_NODES)

    # --- TPU-friendly padded shapes: lane-dense (128) feature dims, tiled N ---
    n_p = _round_up(N_NODES, LANE)
    f_p = _round_up(IN_CH, LANE)
    h_p = _round_up(HIDDEN, LANE)
    o_p = _round_up(OUT_CH, LANE)

    # Large tiles: fill the VMEM budget (fewer grid steps, longer DMA bursts);
    # at tm=1024, tk=2048 the A tile is 4 MiB bf16 (x2 buffers), acc 0.5 MiB —
    # comfortably under the 48 MiB limit on all generations.
    tm = _pick_tile(n_p, (1024, 512, 256, 128))
    tk = _pick_tile(n_p, (2048, 1024, 512, 256, 128))

    # bf16 everywhere on the HBM-bound path (A_hat dominates, then X / h).
    a_hat_p = _pad2(a_hat, (n_p, n_p)).astype(jnp.bfloat16)
    x_p = _pad2(x, (n_p, f_p)).astype(jnp.bfloat16)
    m_p = _pad2(m_norm, (NUM_GRAPHS, n_p)).astype(jnp.bfloat16)

    padded_params = {
        "conv_w": [_pad2(w, (_round_up(w.shape[0], LANE), h_p)).astype(jnp.bfloat16)
                   for w in params["conv_w"]],
        "conv_b": [_pad1(b, h_p) for b in params["conv_b"]],            # f32
        "head_w": _pad2(params["head_w"], (h_p, o_p)).astype(jnp.bfloat16),
        "head_b": _pad1(params["head_b"], o_p),                         # f32
    }

    out_padded = builtin_gnn_forward(padded_params, x_p, a_hat_p, m_p,
                                     in_ch=IN_CH, hidden=HIDDEN, tm=tm, tk=tk)
    out = jax.block_until_ready(out_padded)[:, :OUT_CH]
    assert out.shape == (NUM_GRAPHS, OUT_CH)

    ref = reference_forward(params, x, a_hat, m_norm)
    assert jnp.allclose(out, ref, atol=3e-2, rtol=5e-2), (out, ref)

    print("KERNEL_OK")
</pallas_src>

<mosaic_0001>
module attributes {stable_mosaic.version = 11 : i64} {
  func.func @gcn_layer_kernel(%arg0: i32, %arg1: i32, %arg2: memref<128x128xbf16, #tpu.memory_space<vmem>>, %arg3: memref<128x128xbf16, #tpu.memory_space<vmem>>, %arg4: memref<128x128xbf16, #tpu.memory_space<vmem>>, %arg5: memref<1x128xf32, #tpu.memory_space<vmem>>, %arg6: memref<128x128xbf16, #tpu.memory_space<vmem>>, %arg7: memref<128x128xf32, #tpu.memory_space<vmem>>) attributes {dimension_semantics = [#tpu.dimension_semantics<parallel>, #tpu.dimension_semantics<arbitrary>], iteration_bounds = array<i64: 1, 1>, scalar_prefetch = 0 : i64, scratch_operands = 1 : i64, tpu.core_type = #tpu.core_type<tc>, window_params = [{transform_indices = @transform_0, window_bounds = array<i64: 128, 128>}, {pipeline_mode = #tpu.pipeline_mode<synchronous>, transform_indices = @transform_1, window_bounds = array<i64: 128, 128>}, {pipeline_mode = #tpu.pipeline_mode<synchronous>, transform_indices = @transform_2, window_bounds = array<i64: 128, 128>}, {pipeline_mode = #tpu.pipeline_mode<synchronous>, transform_indices = @transform_3, window_bounds = array<i64: 1, 128>}, {transform_indices = @transform_4, window_bounds = array<i64: 128, 128>}]} {
    %c0_i32 = arith.constant 0 : i32
    %0 = arith.cmpi eq, %arg1, %c0_i32 : i32
    %1 = arith.extui %0 : i1 to i32
    %c0_i32_0 = arith.constant 0 : i32
    %2 = arith.cmpi ne, %1, %c0_i32_0 : i32
    scf.if %2 {
      %cst_9 = arith.constant 0.000000e+00 : f32
      %15 = vector.broadcast %cst_9 : f32 to vector<128x128xf32>
      %c0_10 = arith.constant 0 : index
      %c0_11 = arith.constant 0 : index
      %16 = vector.load %arg7[%c0_10, %c0_11] : memref<128x128xf32, #tpu.memory_space<vmem>>, vector<128x128xf32>
      tpu.vector_store %arg7[%c0_10, %c0_11], %15 {strides = array<i32>} : memref<128x128xf32, #tpu.memory_space<vmem>>, vector<128x128xf32>,
    } else {
    }
    %c128_i32 = arith.constant 128 : i32
    %3 = arith.muli %arg1, %c128_i32 : i32
    %4 = tpu.assume_multiple %3, 128 : i32
    %5 = arith.index_cast %4 : i32 to index
    %c0 = arith.constant 0 : index
    %6 = vector.load %arg3[%5, %c0] : memref<128x128xbf16, #tpu.memory_space<vmem>>, vector<128x128xbf16>
    %c0_1 = arith.constant 0 : index
    %c0_2 = arith.constant 0 : index
    %7 = vector.load %arg7[%c0_1, %c0_2] : memref<128x128xf32, #tpu.memory_space<vmem>>, vector<128x128xf32>
    %c0_3 = arith.constant 0 : index
    %c0_4 = arith.constant 0 : index
    %8 = vector.load %arg2[%c0_3, %c0_4] : memref<128x128xbf16, #tpu.memory_space<vmem>>, vector<128x128xbf16>
    %cst = arith.constant dense<0.000000e+00> : vector<128x128xf32>
    %9 = tpu.matmul %8, %6, %cst {dimension_numbers = #tpu.dot_dimension_numbers<[1], [0], [0], [1], [0, 0, 1, 1], [], []>} : vector<128x128xbf16>, vector<128x128xbf16>, vector<128x128xf32> -> vector<128x128xf32>
    %10 = arith.addf %7, %9 : vector<128x128xf32>
    %c0_5 = arith.constant 0 : index
    %c0_6 = arith.constant 0 : index
    %11 = vector.load %arg7[%c0_5, %c0_6] : memref<128x128xf32, #tpu.memory_space<vmem>>, vector<128x128xf32>
    tpu.vector_store %arg7[%c0_5, %c0_6], %10 {strides = array<i32>} : memref<128x128xf32, #tpu.memory_space<vmem>>, vector<128x128xf32>,
    %c0_i32_7 = arith.constant 0 : i32
    %12 = arith.cmpi eq, %arg1, %c0_i32_7 : i32
    %13 = arith.extui %12 : i1 to i32
    %c0_i32_8 = arith.constant 0 : i32
    %14 = arith.cmpi ne, %13, %c0_i32_8 : i32
    scf.if %14 {
      %c0_9 = arith.constant 0 : index
      %c0_10 = arith.constant 0 : index
      %15 = vector.load %arg7[%c0_9, %c0_10] : memref<128x128xf32, #tpu.memory_space<vmem>>, vector<128x128xf32>
      %16 = arith.truncf %15 : vector<128x128xf32> to vector<128x128xbf16>
      %c0_11 = arith.constant 0 : index
      %c0_12 = arith.constant 0 : index
      %17 = vector.load %arg4[%c0_11, %c0_12] : memref<128x128xbf16, #tpu.memory_space<vmem>>, vector<128x128xbf16>
      %cst_13 = arith.constant dense<0.000000e+00> : vector<128x128xf32>
      %18 = tpu.matmul %16, %17, %cst_13 {dimension_numbers = #tpu.dot_dimension_numbers<[1], [0], [0], [1], [0, 0, 1, 1], [], []>} : vector<128x128xbf16>, vector<128x128xbf16>, vector<128x128xf32> -> vector<128x128xf32>
      %c0_14 = arith.constant 0 : index
      %c0_15 = arith.constant 0 : index
      %19 = vector.load %arg5[%c0_14, %c0_15] : memref<1x128xf32, #tpu.memory_space<vmem>>, vector<1x128xf32>
      %20 = vector.broadcast %19 : vector<1x128xf32> to vector<128x128xf32>
      %21 = arith.addf %18, %20 : vector<128x128xf32>
      %cst_16 = arith.constant 0.000000e+00 : f32
      %22 = vector.broadcast %cst_16 : f32 to vector<128x128xf32>
      %23 = arith.maximumf %21, %22 : vector<128x128xf32>
      %24 = arith.truncf %23 : vector<128x128xf32> to vector<128x128xbf16>
      %c0_17 = arith.constant 0 : index
      %c0_18 = arith.constant 0 : index
      %25 = vector.load %arg6[%c0_17, %c0_18] : memref<128x128xbf16, #tpu.memory_space<vmem>>, vector<128x128xbf16>
      tpu.vector_store %arg6[%c0_17, %c0_18], %24 {strides = array<i32>} : memref<128x128xbf16, #tpu.memory_space<vmem>>, vector<128x128xbf16>,
    } else {
    }
    return
  }
  func.func @transform_0(%arg0: i32, %arg1: i32) -> (i32, i32) {
    %c0_i32 = arith.constant 0 : i32
    return %arg0, %arg1 : i32, i32
  }
  func.func @transform_1(%arg0: i32, %arg1: i32) -> (i32, i32) {
    %c0_i32 = arith.constant 0 : i32
    %c0_i32_0 = arith.constant 0 : i32
    %c0_i32_1 = arith.constant 0 : i32
    return %c0_i32, %c0_i32_0 : i32, i32
  }
  func.func @transform_2(%arg0: i32, %arg1: i32) -> (i32, i32) {
    %c0_i32 = arith.constant 0 : i32
    %c0_i32_0 = arith.constant 0 : i32
    %c0_i32_1 = arith.constant 0 : i32
    return %c0_i32, %c0_i32_0 : i32, i32
  }
  func.func @transform_3(%arg0: i32, %arg1: i32) -> (i32, i32) {
    %c0_i32 = arith.constant 0 : i32
    %c0_i32_0 = arith.constant 0 : i32
    %c0_i32_1 = arith.constant 0 : i32
    return %c0_i32, %c0_i32_0 : i32, i32
  }
  func.func @transform_4(%arg0: i32, %arg1: i32) -> (i32, i32) {
    %c0_i32 = arith.constant 0 : i32
    %c0_i32_0 = arith.constant 0 : i32
    return %arg0, %c0_i32 : i32, i32
  }
}

</mosaic_0001>

<llo_original>
// kernel: tpu_custom_call.1
$region0: #{tpu_custom_call.1}
  #allocation0 [shape = 'u32[]', space=smem, size = 0x4, offset = 0x4, fixed_abs, tag = 'smem constant byte address 0x4 - core index']
  #allocation1 [shape = 'u32[72,128]{1,0:T(1,128)}', space=vmem, size = 0x9000, scoped, tag = 'internal scratch']
  #allocation2 [shape = 'f32[128,128]{1,0:T(8,128)}', space=vmem, size = 0x10000, scoped, tag = 'scratch operand']
  %s0 = inlined_call_operand.hbm [shape: bf16[128,128], index: 0, kind: input, shape index: {}]
  %s1 = inlined_call_operand.hbm [shape: bf16[128,128], index: 1, kind: input, shape index: {}]
  %s2 = inlined_call_operand.hbm [shape: bf16[128,128], index: 2, kind: input, shape index: {}]
  %s3 = inlined_call_operand.vmem [shape: f32[1,128], index: 3, kind: input, shape index: {}]
  %s4 = inlined_call_operand.hbm [shape: bf16[128,128], index: 4, kind: output, shape index: {}]
  %s5 = sld [smem:[#allocation0]]
  $region46: #{tpu_custom_call.1} parent=0
    _
  %s7 = ssub.s32 1, %s5
  %s8 = scalar_select 0, %s7, %s5
  $region1: #{tpu_custom_call.1} parent=0
    #allocation3 [shape = 'u8[32768]{0}', space=vmem, size = 0x8000, scoped, tag = 'input window, operand 0, single buffered']
    #allocation4 [shape = 's32[1]{0}', space=sflag, size = 0x4, scoped, tag = 'scoped memory for tpu_custom_call.1']
    #allocation5 [shape = 's32[1]{0}', space=sflag, size = 0x4, scoped, tag = 'scoped memory for tpu_custom_call.1']
    #allocation6 [shape = 'u8[32768]{0}', space=vmem, size = 0x8000, scoped, tag = 'input window, operand 1, single buffered']
    #allocation7 [shape = 's32[1]{0}', space=sflag, size = 0x4, scoped, tag = 'scoped memory for tpu_custom_call.1']
    #allocation8 [shape = 'u8[32768]{0}', space=vmem, size = 0x8000, scoped, tag = 'input window, operand 2, single buffered']
    #allocation9 [shape = 'u8[32768]{0}', space=vmem, size = 0x8000, scoped, tag = 'output window, operand 0, single buffered']
    %9 = vsyncpa [#allocation4], 0
    %10 = vsyncpa [#allocation7], 0
    %11 = vsyncpa [#allocation5], 0
    // Predicated region
    $region2: #{tpu_custom_call.1} parent=1 // pred_check
      _
    $region3: #{tpu_custom_call.1} parent=1 // pred_check_branch
      %13 = sbr.rel (0) target = $region5
    $region4: #{tpu_custom_call.1} parent=1 // pred_region
      %15 = vsyncadd [#allocation4], 0
      %s16 = sshll.u32 %s0, 4
      %s17 = int_to_ptr.hbm [resolvable:$true] %s16
      %s18 = sshll.u32 [#allocation3], 4
      %s19 = int_to_ptr.vmem [resolvable:$true] %s18
      %24 = dma.hbm_to_vmem [thread:$0]  %s17, 1024, %s19, [#allocation4], 64, 64, 4
    $region5: #{tpu_custom_call.1} parent=1 // pred_fallthru
      _
    // Predicated region
    $region6: #{tpu_custom_call.1} parent=1 // pred_check
      _
    $region7: #{tpu_custom_call.1} parent=1 // pred_check_branch
      %26 = sbr.rel (0) target = $region9
    $region8: #{tpu_custom_call.1} parent=1 // pred_region
      %28 = vsyncadd [#allocation7], 0
      %s29 = sshll.u32 %s1, 4
      %s30 = int_to_ptr.hbm [resolvable:$true] %s29
      %s31 = sshll.u32 [#allocation6], 4
      %s32 = int_to_ptr.vmem [resolvable:$true] %s31
      %37 = dma.hbm_to_vmem [thread:$0]  %s30, 1024, %s32, [#allocation7], 64, 64, 4
    $region9: #{tpu_custom_call.1} parent=1 // pred_fallthru
      _
    // Predicated region
    $region10: #{tpu_custom_call.1} parent=1 // pred_check
      _
    $region11: #{tpu_custom_call.1} parent=1 // pred_check_branch
      %39 = sbr.rel (0) target = $region13
    $region12: #{tpu_custom_call.1} parent=1 // pred_region
      %41 = vsyncadd [#allocation7], 0
      %s42 = sshll.u32 %s2, 4
      %s43 = int_to_ptr.hbm [resolvable:$true] %s42
      %s44 = sshll.u32 [#allocation8], 4
      %s45 = int_to_ptr.vmem [resolvable:$true] %s44
      %50 = dma.hbm_to_vmem [thread:$0]  %s43, 1024, %s45, [#allocation7], 64, 64, 4
    $region13: #{tpu_custom_call.1} parent=1 // pred_fallthru
      _
    // Predicated region
    $region14: #{tpu_custom_call.1} parent=1 // pred_check
      _
    $region15: #{tpu_custom_call.1} parent=1 // pred_check_branch
      %52 = sbr.rel (0) target = $region17
    $region16: #{tpu_custom_call.1} parent=1 // pred_region
      _
    $region17: #{tpu_custom_call.1} parent=1 // pred_fallthru
      _
    // Predicated region
    $region18: #{tpu_custom_call.1} parent=1 // pred_check
      _
    $region19: #{tpu_custom_call.1} parent=1 // pred_check_branch
      %54 = sbr.rel (0) target = $region21
    $region20: #{tpu_custom_call.1} parent=1 // pred_region
      %56 = dma.done [#allocation4], 1024
    $region21: #{tpu_custom_call.1} parent=1 // pred_fallthru
      _
    // Predicated region
    $region22: #{tpu_custom_call.1} parent=1 // pred_check
      _
    $region23: #{tpu_custom_call.1} parent=1 // pred_check_branch
      %58 = sbr.rel (0) target = $region25
    $region24: #{tpu_custom_call.1} parent=1 // pred_region
      %60 = dma.done [#allocation7], 1024
    $region25: #{tpu_custom_call.1} parent=1 // pred_fallthru
      _
    // Predicated region
    $region26: #{tpu_custom_call.1} parent=1 // pred_check
      _
    $region27: #{tpu_custom_call.1} parent=1 // pred_check_branch
      %62 = sbr.rel (0) target = $region29
    $region28: #{tpu_custom_call.1} parent=1 // pred_region
      %64 = dma.done [#allocation7], 1024
    $region29: #{tpu_custom_call.1} parent=1 // pred_fallthru
      _
    %p65 = scmp.eq.s32.totalorder 0, 0
    // Predicated region
    $region30: #{tpu_custom_call.1} parent=1 // pred_check
      %p66 = pneg %p65
    $region31: #{tpu_custom_call.1} parent=1 // pred_check_branch
      %68 = sbr.rel (%p66) target = $region33
    $region32: #{tpu_custom_call.1} parent=1 // pred_region
      %69 = vst [vmem:[#allocation2] sm:$0xff] 0.0
      %70 = vst [vmem:[#allocation2 + $0x8] sm:$0xff] 0.0
      %71 = vst [vmem:[#allocation2 + $0x10] sm:$0xff] 0.0
      %72 = vst [vmem:[#allocation2 + $0x18] sm:$0xff] 0.0
      %73 = vst [vmem:[#allocation2 + $0x20] sm:$0xff] 0.0
      %74 = vst [vmem:[#allocation2 + $0x28] sm:$0xff] 0.0
      %75 = vst [vmem:[#allocation2 + $0x30] sm:$0xff] 0.0
      %76 = vst [vmem:[#allocation2 + $0x38] sm:$0xff] 0.0
      %77 = vst [vmem:[#allocation2 + $0x40] sm:$0xff] 0.0
      %78 = vst [vmem:[#allocation2 + $0x48] sm:$0xff] 0.0
      %79 = vst [vmem:[#allocation2 + $0x50] sm:$0xff] 0.0
      %80 = vst [vmem:[#allocation2 + $0x58] sm:$0xff] 0.0
      %81 = vst [vmem:[#allocation2 + $0x60] sm:$0xff] 0.0
      %82 = vst [vmem:[#allocation2 + $0x68] sm:$0xff] 0.0
      %83 = vst [vmem:[#allocation2 + $0x70] sm:$0xff] 0.0
      %84 = vst [vmem:[#allocation2 + $0x78] sm:$0xff] 0.0
    $region33: #{tpu_custom_call.1} parent=1 // pred_fallthru
      _
    %s85 = smul.u32 0, 128
    %s86 = sshra.s32 %s85, 3
    %s87 = sand.u32 %s85, 7
    %s88 = smul.addr %s86, 4
    %s89 = scalar_lea.vmem [#allocation6], %s88
    %v90 = vld [vmem:[%s89] sm:$0xf]
    %v91 = vld [vmem:[%s89 + $0x4] sm:$0xf]
    %v92 = vld [vmem:[%s89 + $0x8] sm:$0xf]
    %v93 = vld [vmem:[%s89 + $0xc] sm:$0xf]
    %v94 = vld [vmem:[%s89 + $0x10] sm:$0xf]
    %v95 = vld [vmem:[%s89 + $0x14] sm:$0xf]
    %v96 = vld [vmem:[%s89 + $0x18] sm:$0xf]
    %v97 = vld [vmem:[%s89 + $0x1c] sm:$0xf]
    %v98 = vld [vmem:[%s89 + $0x20] sm:$0xf]
    %v99 = vld [vmem:[%s89 + $0x24] sm:$0xf]
    %v100 = vld [vmem:[%s89 + $0x28] sm:$0xf]
    %v101 = vld [vmem:[%s89 + $0x2c] sm:$0xf]
    %v102 = vld [vmem:[%s89 + $0x30] sm:$0xf]
    %v103 = vld [vmem:[%s89 + $0x34] sm:$0xf]
    %v104 = vld [vmem:[%s89 + $0x38] sm:$0xf]
    %v105 = vld [vmem:[%s89 + $0x3c] sm:$0xf]
    %v106 = vld [vmem:[#allocation2] sm:$0xff]
    %v107 = vld [vmem:[#allocation2 + $0x8] sm:$0xff]
    %v108 = vld [vmem:[#allocation2 + $0x10] sm:$0xff]
    %v109 = vld [vmem:[#allocation2 + $0x18] sm:$0xff]
    %v110 = vld [vmem:[#allocation2 + $0x20] sm:$0xff]
    %v111 = vld [vmem:[#allocation2 + $0x28] sm:$0xff]
    %v112 = vld [vmem:[#allocation2 + $0x30] sm:$0xff]
    %v113 = vld [vmem:[#allocation2 + $0x38] sm:$0xff]
    %v114 = vld [vmem:[#allocation2 + $0x40] sm:$0xff]
    %v115 = vld [vmem:[#allocation2 + $0x48] sm:$0xff]
    %v116 = vld [vmem:[#allocation2 + $0x50] sm:$0xff]
    %v117 = vld [vmem:[#allocation2 + $0x58] sm:$0xff]
    %v118 = vld [vmem:[#allocation2 + $0x60] sm:$0xff]
    %v119 = vld [vmem:[#allocation2 + $0x68] sm:$0xff]
    %v120 = vld [vmem:[#allocation2 + $0x70] sm:$0xff]
    %v121 = vld [vmem:[#allocation2 + $0x78] sm:$0xff]
    %v122 = vld [vmem:[#allocation3] sm:$0xf]
    %v123 = vld [vmem:[#allocation3 + $0x4] sm:$0xf]
    %v124 = vld [vmem:[#allocation3 + $0x8] sm:$0xf]
    %v125 = vld [vmem:[#allocation3 + $0xc] sm:$0xf]
    %v126 = vld [vmem:[#allocation3 + $0x10] sm:$0xf]
    %v127 = vld [vmem:[#allocation3 + $0x14] sm:$0xf]
    %v128 = vld [vmem:[#allocation3 + $0x18] sm:$0xf]
    %v129 = vld [vmem:[#allocation3 + $0x1c] sm:$0xf]
    %v130 = vld [vmem:[#allocation3 + $0x20] sm:$0xf]
    %v131 = vld [vmem:[#allocation3 + $0x24] sm:$0xf]
    %v132 = vld [vmem:[#allocation3 + $0x28] sm:$0xf]
    %v133 = vld [vmem:[#allocation3 + $0x2c] sm:$0xf]
    %v134 = vld [vmem:[#allocation3 + $0x30] sm:$0xf]
    %v135 = vld [vmem:[#allocation3 + $0x34] sm:$0xf]
    %v136 = vld [vmem:[#allocation3 + $0x38] sm:$0xf]
    %v137 = vld [vmem:[#allocation3 + $0x3c] sm:$0xf]
    %v154 = vunpack.c.l.b16 %v122
    %v155 = vunpack.c.l.b16 %v123
    %v156 = vunpack.c.l.b16 %v124
    %v157 = vunpack.c.l.b16 %v125
    %v158 = vunpack.c.l.b16 %v126
    %v159 = vunpack.c.l.b16 %v127
    %v160 = vunpack.c.l.b16 %v128
    %v161 = vunpack.c.l.b16 %v129
    %v162 = vunpack.c.l.b16 %v130
    %v163 = vunpack.c.l.b16 %v131
    %v164 = vunpack.c.l.b16 %v132
    %v165 = vunpack.c.l.b16 %v133
    %v166 = vunpack.c.l.b16 %v134
    %v167 = vunpack.c.l.b16 %v135
    %v168 = vunpack.c.l.b16 %v136
    %v169 = vunpack.c.l.b16 %v137
    %v170 = vpack.c.b16 %v155, %v154
    %v171 = vpack.c.b16 %v157, %v156
    %v172 = vpack.c.b16 %v159, %v158
    %v173 = vpack.c.b16 %v161, %v160
    %v174 = vpack.c.b16 %v163, %v162
    %v175 = vpack.c.b16 %v165, %v164
    %v176 = vpack.c.b16 %v167, %v166
    %v177 = vpack.c.b16 %v169, %v168
    %v202 = vunpack.c.l.b16 %v90
    %v203 = vunpack.c.l.b16 %v91
    %v204 = vunpack.c.l.b16 %v92
    %v205 = vunpack.c.l.b16 %v93
    %v206 = vunpack.c.l.b16 %v94
    %v207 = vunpack.c.l.b16 %v95
    %v208 = vunpack.c.l.b16 %v96
    %v209 = vunpack.c.l.b16 %v97
    %v210 = vunpack.c.l.b16 %v98
    %v211 = vunpack.c.l.b16 %v99
    %v212 = vunpack.c.l.b16 %v100
    %v213 = vunpack.c.l.b16 %v101
    %v214 = vunpack.c.l.b16 %v102
    %v215 = vunpack.c.l.b16 %v103
    %v216 = vunpack.c.l.b16 %v104
    %v217 = vunpack.c.l.b16 %v105
    %v218 = vpack.c.b16 %v203, %v202
    %v219 = vpack.c.b16 %v205, %v204
    %v220 = vpack.c.b16 %v207, %v206
    %v221 = vpack.c.b16 %v209, %v208
    %v222 = vpack.c.b16 %v211, %v210
    %v223 = vpack.c.b16 %v213, %v212
    %v224 = vpack.c.b16 %v215, %v214
    %v225 = vpack.c.b16 %v217, %v216
    %234 = vmatpush.bf16.msra.mxu0 %v225
    %235 = vmatpush.bf16.msra.mxu0 %v224
    %236 = vmatpush.bf16.msra.mxu0 %v223
    %237 = vmatpush.bf16.msra.mxu0 %v222
    %238 = vmatpush.bf16.msra.mxu0 %v221
    %239 = vmatpush.bf16.msra.mxu0 %v220
    %240 = vmatpush.bf16.msra.mxu0 %v219
    %241 = vmatpush.bf16.msra.mxu0 %v218
    %242 = vmatmul.bf16.gmra.mxu0 %v170
    %v243 = vpop.f32.mrf.mxu0
    %v244 = vadd.f32 0.0, %v243
    %v245 = vpop.f32.mrf.mxu0
    %v246 = vadd.f32 0.0, %v245
    %247 = vmatmul.bf16.gmra.mxu0 %v171
    %v248 = vpop.f32.mrf.mxu0
    %v249 = vadd.f32 0.0, %v248
    %v250 = vpop.f32.mrf.mxu0
    %v251 = vadd.f32 0.0, %v250
    %252 = vmatmul.bf16.gmra.mxu0 %v172
    %v253 = vpop.f32.mrf.mxu0
    %v254 = vadd.f32 0.0, %v253
    %v255 = vpop.f32.mrf.mxu0
    %v256 = vadd.f32 0.0, %v255
    %257 = vmatmul.bf16.gmra.mxu0 %v173
    %v258 = vpop.f32.mrf.mxu0
    %v259 = vadd.f32 0.0, %v258
    %v260 = vpop.f32.mrf.mxu0
    %v261 = vadd.f32 0.0, %v260
    %262 = vmatmul.bf16.gmra.mxu0 %v174
    %v263 = vpop.f32.mrf.mxu0
    %v264 = vadd.f32 0.0, %v263
    %v265 = vpop.f32.mrf.mxu0
    %v266 = vadd.f32 0.0, %v265
    %267 = vmatmul.bf16.gmra.mxu0 %v175
    %v268 = vpop.f32.mrf.mxu0
    %v269 = vadd.f32 0.0, %v268
    %v270 = vpop.f32.mrf.mxu0
    %v271 = vadd.f32 0.0, %v270
    %272 = vmatmul.bf16.gmra.mxu0 %v176
    %v273 = vpop.f32.mrf.mxu0
    %v274 = vadd.f32 0.0, %v273
    %v275 = vpop.f32.mrf.mxu0
    %v276 = vadd.f32 0.0, %v275
    %277 = vmatmul.bf16.gmra.mxu0 %v177
    %v278 = vpop.f32.mrf.mxu0
    %v279 = vadd.f32 0.0, %v278
    %v280 = vpop.f32.mrf.mxu0
    %v281 = vadd.f32 0.0, %v280
    %282 = vdwg.mxu0
    %v283 = vadd.f32 %v106, %v244
    %v284 = vadd.f32 %v107, %v246
    %v285 = vadd.f32 %v108, %v249
    %v286 = vadd.f32 %v109, %v251
    %v287 = vadd.f32 %v110, %v254
    %v288 = vadd.f32 %v111, %v256
    %v289 = vadd.f32 %v112, %v259
    %v290 = vadd.f32 %v113, %v261
    %v291 = vadd.f32 %v114, %v264
    %v292 = vadd.f32 %v115, %v266
    %v293 = vadd.f32 %v116, %v269
    %v294 = vadd.f32 %v117, %v271
    %v295 = vadd.f32 %v118, %v274
    %v296 = vadd.f32 %v119, %v276
    %v297 = vadd.f32 %v120, %v279
    %v298 = vadd.f32 %v121, %v281
    %299 = vst [vmem:[#allocation2] sm:$0xff] %v283
    %300 = vst [vmem:[#allocation2 + $0x8] sm:$0xff] %v284
    %301 = vst [vmem:[#allocation2 + $0x10] sm:$0xff] %v285
    %302 = vst [vmem:[#allocation2 + $0x18] sm:$0xff] %v286
    %303 = vst [vmem:[#allocation2 + $0x20] sm:$0xff] %v287
    %304 = vst [vmem:[#allocation2 + $0x28] sm:$0xff] %v288
    %305 = vst [vmem:[#allocation2 + $0x30] sm:$0xff] %v289
    %306 = vst [vmem:[#allocation2 + $0x38] sm:$0xff] %v290
    %307 = vst [vmem:[#allocation2 + $0x40] sm:$0xff] %v291
    %308 = vst [vmem:[#allocation2 + $0x48] sm:$0xff] %v292
    %309 = vst [vmem:[#allocation2 + $0x50] sm:$0xff] %v293
    %310 = vst [vmem:[#allocation2 + $0x58] sm:$0xff] %v294
    %311 = vst [vmem:[#allocation2 + $0x60] sm:$0xff] %v295
    %312 = vst [vmem:[#allocation2 + $0x68] sm:$0xff] %v296
    %313 = vst [vmem:[#allocation2 + $0x70] sm:$0xff] %v297
    %314 = vst [vmem:[#allocation2 + $0x78] sm:$0xff] %v298
    // Predicated region
    $region34: #{tpu_custom_call.1} parent=1 // pred_check
      %p315 = pneg %p65
    $region35: #{tpu_custom_call.1} parent=1 // pred_check_branch
      %317 = sbr.rel (%p315) target = $region37
    $region36: #{tpu_custom_call.1} parent=1 // pred_region
      %v318 = vld [vmem:[#allocation2] sm:$0xff]
      %v319 = vld [vmem:[#allocation2 + $0x8] sm:$0xff]
      %v320 = vld [vmem:[#allocation2 + $0x10] sm:$0xff]
      %v321 = vld [vmem:[#allocation2 + $0x18] sm:$0xff]
      %v322 = vld [vmem:[#allocation2 + $0x20] sm:$0xff]
      %v323 = vld [vmem:[#allocation2 + $0x28] sm:$0xff]
      %v324 = vld [vmem:[#allocation2 + $0x30] sm:$0xff]
      %v325 = vld [vmem:[#allocation2 + $0x38] sm:$0xff]
      %v326 = vld [vmem:[#allocation2 + $0x40] sm:$0xff]
      %v327 = vld [vmem:[#allocation2 + $0x48] sm:$0xff]
      %v328 = vld [vmem:[#allocation2 + $0x50] sm:$0xff]
      %v329 = vld [vmem:[#allocation2 + $0x58] sm:$0xff]
      %v330 = vld [vmem:[#allocation2 + $0x60] sm:$0xff]
      %v331 = vld [vmem:[#allocation2 + $0x68] sm:$0xff]
      %v332 = vld [vmem:[#allocation2 + $0x70] sm:$0xff]
      %v333 = vld [vmem:[#allocation2 + $0x78] sm:$0xff]
      %v334 = vpack.c.bf16 %v319, %v318
      %v335 = vpack.c.bf16 %v321, %v320
      %v336 = vpack.c.bf16 %v323, %v322
      %v337 = vpack.c.bf16 %v325, %v324
      %v338 = vpack.c.bf16 %v327, %v326
      %v339 = vpack.c.bf16 %v329, %v328
      %v340 = vpack.c.bf16 %v331, %v330
      %v341 = vpack.c.bf16 %v333, %v332
      %v342 = vld [vmem:[#allocation8] sm:$0xf]
      %v343 = vld [vmem:[#allocation8 + $0x4] sm:$0xf]
      %v344 = vld [vmem:[#allocation8 + $0x8] sm:$0xf]
      %v345 = vld [vmem:[#allocation8 + $0xc] sm:$0xf]
      %v346 = vld [vmem:[#allocation8 + $0x10] sm:$0xf]
      %v347 = vld [vmem:[#allocation8 + $0x14] sm:$0xf]
      %v348 = vld [vmem:[#allocation8 + $0x18] sm:$0xf]
      %v349 = vld [vmem:[#allocation8 + $0x1c] sm:$0xf]
      %v350 = vld [vmem:[#allocation8 + $0x20] sm:$0xf]
      %v351 = vld [vmem:[#allocation8 + $0x24] sm:$0xf]
      %v352 = vld [vmem:[#allocation8 + $0x28] sm:$0xf]
      %v353 = vld [vmem:[#allocation8 + $0x2c] sm:$0xf]
      %v354 = vld [vmem:[#allocation8 + $0x30] sm:$0xf]
      %v355 = vld [vmem:[#allocation8 + $0x34] sm:$0xf]
      %v356 = vld [vmem:[#allocation8 + $0x38] sm:$0xf]
      %v357 = vld [vmem:[#allocation8 + $0x3c] sm:$0xf]
      %v358 = vld [vmem:[%s3] sm:$0x1]
      %v360 = vperm.slane %v358, 0
      %v378 = vunpack.c.l.b16 %v342
      %v379 = vunpack.c.l.b16 %v343
      %v380 = vunpack.c.l.b16 %v344
      %v381 = vunpack.c.l.b16 %v345
      %v382 = vunpack.c.l.b16 %v346
      %v383 = vunpack.c.l.b16 %v347
      %v384 = vunpack.c.l.b16 %v348
      %v385 = vunpack.c.l.b16 %v349
      %v386 = vunpack.c.l.b16 %v350
      %v387 = vunpack.c.l.b16 %v351
      %v388 = vunpack.c.l.b16 %v352
      %v389 = vunpack.c.l.b16 %v353
      %v390 = vunpack.c.l.b16 %v354
      %v391 = vunpack.c.l.b16 %v355
      %v392 = vunpack.c.l.b16 %v356
      %v393 = vunpack.c.l.b16 %v357
      %v394 = vpack.c.b16 %v379, %v378
      %v395 = vpack.c.b16 %v381, %v380
      %v396 = vpack.c.b16 %v383, %v382
      %v397 = vpack.c.b16 %v385, %v384
      %v398 = vpack.c.b16 %v387, %v386
      %v399 = vpack.c.b16 %v389, %v388
      %v400 = vpack.c.b16 %v391, %v390
      %v401 = vpack.c.b16 %v393, %v392
      %410 = vmatpush.bf16.msra.mxu0 %v401
      %411 = vmatpush.bf16.msra.mxu0 %v400
      %412 = vmatpush.bf16.msra.mxu0 %v399
      %413 = vmatpush.bf16.msra.mxu0 %v398
      %414 = vmatpush.bf16.msra.mxu0 %v397
      %415 = vmatpush.bf16.msra.mxu0 %v396
      %416 = vmatpush.bf16.msra.mxu0 %v395
      %417 = vmatpush.bf16.msra.mxu0 %v394
      %418 = vmatmul.bf16.gmra.mxu0 %v334
      %v419 = vpop.f32.mrf.mxu0
      %v420 = vadd.f32 %v360, %v419
      %v421 = vpop.f32.mrf.mxu0
      %v422 = vadd.f32 %v360, %v421
      %423 = vmatmul.bf16.gmra.mxu0 %v335
      %v424 = vpop.f32.mrf.mxu0
      %v425 = vadd.f32 %v360, %v424
      %v426 = vpop.f32.mrf.mxu0
      %v427 = vadd.f32 %v360, %v426
      %428 = vmatmul.bf16.gmra.mxu0 %v336
      %v429 = vpop.f32.mrf.mxu0
      %v430 = vadd.f32 %v360, %v429
      %v431 = vpop.f32.mrf.mxu0
      %v432 = vadd.f32 %v360, %v431
      %433 = vmatmul.bf16.gmra.mxu0 %v337
      %v434 = vpop.f32.mrf.mxu0
      %v435 = vadd.f32 %v360, %v434
      %v436 = vpop.f32.mrf.mxu0
      %v437 = vadd.f32 %v360, %v436
      %438 = vmatmul.bf16.gmra.mxu0 %v338
      %v439 = vpop.f32.mrf.mxu0
      %v440 = vadd.f32 %v360, %v439
      %v441 = vpop.f32.mrf.mxu0
      %v442 = vadd.f32 %v360, %v441
      %443 = vmatmul.bf16.gmra.mxu0 %v339
      %v444 = vpop.f32.mrf.mxu0
      %v445 = vadd.f32 %v360, %v444
      %v446 = vpop.f32.mrf.mxu0
      %v447 = vadd.f32 %v360, %v446
      %448 = vmatmul.bf16.gmra.mxu0 %v340
      %v449 = vpop.f32.mrf.mxu0
      %v450 = vadd.f32 %v360, %v449
      %v451 = vpop.f32.mrf.mxu0
      %v452 = vadd.f32 %v360, %v451
      %453 = vmatmul.bf16.gmra.mxu0 %v341
      %v454 = vpop.f32.mrf.mxu0
      %v455 = vadd.f32 %v360, %v454
      %v456 = vpop.f32.mrf.mxu0
      %v457 = vadd.f32 %v360, %v456
      %458 = vdwg.mxu0
      %v459 = vmax.f32 %v420, 0.0
      %v460 = vmax.f32 %v422, 0.0
      %v461 = vmax.f32 %v425, 0.0
      %v462 = vmax.f32 %v427, 0.0
      %v463 = vmax.f32 %v430, 0.0
      %v464 = vmax.f32 %v432, 0.0
      %v465 = vmax.f32 %v435, 0.0
      %v466 = vmax.f32 %v437, 0.0
      %v467 = vmax.f32 %v440, 0.0
      %v468 = vmax.f32 %v442, 0.0
      %v469 = vmax.f32 %v445, 0.0
      %v470 = vmax.f32 %v447, 0.0
      %v471 = vmax.f32 %v450, 0.0
      %v472 = vmax.f32 %v452, 0.0
      %v473 = vmax.f32 %v455, 0.0
      %v474 = vmax.f32 %v457, 0.0
      %v475 = vpack.c.bf16 %v459, %v459
      %v476 = vpack.c.bf16 %v460, %v460
      %v477 = vpack.c.bf16 %v461, %v461
      %v478 = vpack.c.bf16 %v462, %v462
      %v479 = vpack.c.bf16 %v463, %v463
      %v480 = vpack.c.bf16 %v464, %v464
      %v481 = vpack.c.bf16 %v465, %v465
      %v482 = vpack.c.bf16 %v466, %v466
      %v483 = vpack.c.bf16 %v467, %v467
      %v484 = vpack.c.bf16 %v468, %v468
      %v485 = vpack.c.bf16 %v469, %v469
      %v486 = vpack.c.bf16 %v470, %v470
      %v487 = vpack.c.bf16 %v471, %v471
      %v488 = vpack.c.bf16 %v472, %v472
      %v489 = vpack.c.bf16 %v473, %v473
      %v490 = vpack.c.bf16 %v474, %v474
      %491 = vst [vmem:[#allocation9] sm:$0xf] %v475
      %492 = vst [vmem:[#allocation9 + $0x4] sm:$0xf] %v476
      %493 = vst [vmem:[#allocation9 + $0x8] sm:$0xf] %v477
      %494 = vst [vmem:[#allocation9 + $0xc] sm:$0xf] %v478
      %495 = vst [vmem:[#allocation9 + $0x10] sm:$0xf] %v479
      %496 = vst [vmem:[#allocation9 + $0x14] sm:$0xf] %v480
      %497 = vst [vmem:[#allocation9 + $0x18] sm:$0xf] %v481
      %498 = vst [vmem:[#allocation9 + $0x1c] sm:$0xf] %v482
      %499 = vst [vmem:[#allocation9 + $0x20] sm:$0xf] %v483
      %500 = vst [vmem:[#allocation9 + $0x24] sm:$0xf] %v484
      %501 = vst [vmem:[#allocation9 + $0x28] sm:$0xf] %v485
      %502 = vst [vmem:[#allocation9 + $0x2c] sm:$0xf] %v486
      %503 = vst [vmem:[#allocation9 + $0x30] sm:$0xf] %v487
      %504 = vst [vmem:[#allocation9 + $0x34] sm:$0xf] %v488
      %505 = vst [vmem:[#allocation9 + $0x38] sm:$0xf] %v489
      %506 = vst [vmem:[#allocation9 + $0x3c] sm:$0xf] %v490
    $region37: #{tpu_custom_call.1} parent=1 // pred_fallthru
      _
    // Predicated region
    $region38: #{tpu_custom_call.1} parent=1 // pred_check
      _
    $region39: #{tpu_custom_call.1} parent=1 // pred_check_branch
      %508 = sbr.rel (0) target = $region41
    $region40: #{tpu_custom_call.1} parent=1 // pred_region
      %510 = vsyncadd [#allocation5], 0
      %s511 = sshll.u32 [#allocation9], 4
      %s512 = int_to_ptr.vmem [resolvable:$true] %s511
      %s513 = sshll.u32 %s4, 4
      %s514 = int_to_ptr.hbm [resolvable:$true] %s513
      %519 = dma.vmem_to_hbm [thread:$0]  %s512, 1024, %s514, [#allocation5], 64, 64, 4
    $region41: #{tpu_custom_call.1} parent=1 // pred_fallthru
      _
    // Predicated region
    $region42: #{tpu_custom_call.1} parent=1 // pred_check
      _
    $region43: #{tpu_custom_call.1} parent=1 // pred_check_branch
      %521 = sbr.rel (0) target = $region45
    $region44: #{tpu_custom_call.1} parent=1 // pred_region
      %523 = dma.done [#allocation5], 1024
    $region45: #{tpu_custom_call.1} parent=1 // pred_fallthru
      _
    %524 = vsyncpa [#allocation4], 1
    %525 = vsyncpa [#allocation7], 1
    %526 = vsyncpa [#allocation5], 1

</llo_original>
